<compile_context>
chip_gen: v7x
topology: tpu7x:2x2x1
jax: 0.10.0
libtpu: 0.0.40
codegen_flags: <defaults>
</compile_context>

<pallas_src>
import jax
import jax.numpy as jnp
from jax.experimental import pallas as pl
from jax.experimental.pallas import tpu as pltpu


def _copy_kernel(x_ref, o_ref):
    # Pure lane/sublane-dense copy of one tile.
    o_ref[...] = x_ref[...]


def _round_up(v: int, m: int) -> int:
    return ((v + m - 1) // m) * m


def _sublane_align(dtype) -> int:
    # Sub-32-bit dtypes pack along sublanes; keep the second-to-last tile dim
    # a multiple of the packed sublane count for unmasked full-vreg stores.
    itemsize = jnp.dtype(dtype).itemsize
    return {4: 8, 2: 16, 1: 32}.get(itemsize, 8)


def _vmem_budget_bytes():
    """Generation-aware (scoped VMEM limit, per-tile byte cap)."""
    try:
        info = pltpu.get_tpu_info()
        cap = getattr(info, "vmem_capacity_bytes", None) or 64 * 1024 * 1024
    except Exception:
        cap = 64 * 1024 * 1024  # be conservative (v7x-sized) if query fails
    if cap <= 64 * 1024 * 1024:
        # v7x: 64 MiB physical per TC -> 2 in + 2 out buffers must stay small.
        return 48 * 1024 * 1024, 8 * 1024 * 1024
    # v5e / v6e: 128 MiB physical; raise the scoped limit well past the
    # 16/32 MiB defaults and spend it on bigger tiles (fewer grid steps).
    return 96 * 1024 * 1024, 16 * 1024 * 1024


def _tiled_copy_2d(x2: jax.Array) -> jax.Array:
    """Streams an (R, C) slab HBM->VMEM->HBM with lane/sublane-dense tiles."""
    R, C = x2.shape
    itemsize = jnp.dtype(x2.dtype).itemsize
    sub = _sublane_align(x2.dtype)
    vmem_limit, tile_cap_bytes = _vmem_budget_bytes()

    # Lane tile: a multiple of 128 (<= 8192) when the dim allows it, else the
    # full dim (legal full-extent block).  Ragged boundary handled by cdiv.
    if C >= 128:
        tile_c = min(C // 128, 64) * 128
    else:
        tile_c = C
    grid_c = pl.cdiv(C, tile_c)

    # Sublane tile: dtype-aware multiple of `sub`, byte-capped per generation.
    if R >= sub:
        max_rows = max(sub, tile_cap_bytes // max(1, tile_c * itemsize))
        tile_r = max(sub, min((max_rows // sub) * sub, (R // sub) * sub))
        # Prefer >=2 total grid steps on mid/large tensors so v7x's two
        # TensorCores can both stream (no-op on single-TC v5e/v6e).
        total_bytes = R * C * itemsize
        if total_bytes >= (1 << 20) and grid_c * pl.cdiv(R, tile_r) < 2 and R >= 2 * sub:
            tile_r = min(tile_r, _round_up(pl.cdiv(R, 2), sub))
    else:
        tile_r = R
    grid_r = pl.cdiv(R, tile_r)

    return pl.pallas_call(
        _copy_kernel,
        out_shape=jax.ShapeDtypeStruct((R, C), x2.dtype),
        grid=(grid_r, grid_c),
        in_specs=[pl.BlockSpec((tile_r, tile_c), lambda i, j: (i, j))],
        out_specs=pl.BlockSpec((tile_r, tile_c), lambda i, j: (i, j)),
        # Donate the reshaped slab into the output: inside a larger jit the
        # slab is an intermediate buffer, so this halves peak HBM footprint.
        input_output_aliases={0: 0},
        compiler_params=pltpu.CompilerParams(
            dimension_semantics=("parallel", "parallel"),
            vmem_limit_bytes=vmem_limit,
        ),
    )(x2)


def flatten(x: jax.Array, *, use_pallas_copy: bool = False) -> jax.Array:
    """Equivalent of torch's x.view(-1, prod(x.shape[1:]))."""
    flat = 1
    for d in x.shape[1:]:
        flat *= d
    n = x.shape[0] if x.ndim >= 1 else 1

    # Metadata-only reshape: this IS the flatten.  Zero bytes moved.
    x2 = jnp.reshape(x, (n, flat))

    if not use_pallas_copy or x2.size == 0:
        # Production path (top perf recommendation): no kernel at all.
        return x2

    total = n * flat
    sub = _sublane_align(x.dtype)
    if total % 128 == 0:
        # Contiguous slab view decoupled from the (possibly tiny) batch dim:
        # pick a lane width C that divides `total`, is a multiple of 128,
        # <= 8192, and (when possible) leaves >= `sub` full rows.
        c_cap = min(64 * 128, max(128, ((total // sub) // 128) * 128))
        c = (c_cap // 128) * 128
        while total % c != 0:
            c -= 128
        slab = jnp.reshape(x2, (total // c, c))          # metadata-only
        out = _tiled_copy_2d(slab)
        return jnp.reshape(out, (n, flat))               # metadata-only
    # Ragged fallback: tile the (n, flat) view directly with a cdiv grid.
    return _tiled_copy_2d(x2)


if __name__ == "__main__":
    key = jax.random.PRNGKey(0)

    # NCHW conv feature map feeding Flatten (DQnet-style).
    x = jax.random.normal(key, (2, 4, 16, 16), dtype=jnp.float32)
    ref = x.reshape(x.shape[0], -1)

    # Production path: metadata-only reshape, no Pallas call.
    out_view = jax.block_until_ready(flatten(x))

    # Streaming-copy path: exercises the Pallas kernel (slab branch).
    out_copy = jax.block_until_ready(
        jax.jit(lambda t: flatten(t, use_pallas_copy=True))(x)
    )

    assert out_view.shape == (2, 4 * 16 * 16), out_view.shape
    assert out_copy.shape == (2, 4 * 16 * 16), out_copy.shape
    assert out_copy.dtype == x.dtype
    assert jnp.array_equal(out_view, ref), "flatten (view path) mismatch"
    assert jnp.array_equal(out_copy, ref), "flatten (copy path) mismatch"

    # Second shape: flat dim (105) not a multiple of 128 -> exercises the
    # ragged cdiv-tiled fallback path.
    x2 = jax.random.normal(jax.random.PRNGKey(1), (16, 3, 5, 7), dtype=jnp.float32)
    out2 = jax.block_until_ready(
        jax.jit(lambda t: flatten(t, use_pallas_copy=True))(x2)
    )
    ref2 = x2.reshape(16, -1)
    assert out2.shape == (16, 105), out2.shape
    assert jnp.array_equal(out2, ref2), "flatten (ragged copy path) mismatch"

    print("KERNEL_OK")
</pallas_src>

<mosaic_0001>
module attributes {stable_mosaic.version = 11 : i64} {
  func.func @_copy_kernel(%arg0: i32, %arg1: i32, %arg2: memref<8x256xf32, #tpu.memory_space<vmem>>, %arg3: memref<8x256xf32, #tpu.memory_space<vmem>>) attributes {dimension_semantics = [#tpu.dimension_semantics<parallel>, #tpu.dimension_semantics<parallel>], iteration_bounds = array<i64: 1, 1>, scalar_prefetch = 0 : i64, scratch_operands = 0 : i64, tpu.core_type = #tpu.core_type<tc>, window_params = [{transform_indices = @transform_0, window_bounds = array<i64: 8, 256>}, {transform_indices = @transform_1, window_bounds = array<i64: 8, 256>}]} {
    %c0 = arith.constant 0 : index
    %c0_0 = arith.constant 0 : index
    %0 = vector.load %arg2[%c0, %c0_0] : memref<8x256xf32, #tpu.memory_space<vmem>>, vector<8x256xf32>
    %c0_1 = arith.constant 0 : index
    %c0_2 = arith.constant 0 : index
    %1 = vector.load %arg3[%c0_1, %c0_2] : memref<8x256xf32, #tpu.memory_space<vmem>>, vector<8x256xf32>
    tpu.vector_store %arg3[%c0_1, %c0_2], %0 {strides = array<i32>} : memref<8x256xf32, #tpu.memory_space<vmem>>, vector<8x256xf32>,
    return
  }
  func.func @transform_0(%arg0: i32, %arg1: i32) -> (i32, i32) {
    %c0_i32 = arith.constant 0 : i32
    return %arg0, %arg1 : i32, i32
  }
  func.func @transform_1(%arg0: i32, %arg1: i32) -> (i32, i32) {
    %c0_i32 = arith.constant 0 : i32
    return %arg0, %arg1 : i32, i32
  }
}

</mosaic_0001>

<llo_original>
// kernel: _lambda_.1
$region0: #{_lambda_.1}
  #allocation0 [shape = 'u32[]', space=smem, size = 0x4, offset = 0x4, fixed_abs, tag = 'smem constant byte address 0x4 - core index']
  #allocation1 [shape = 'u32[144,128]{1,0:T(1,128)}', space=vmem, size = 0x12000, scoped, tag = 'internal scratch']
  %s0 = inlined_call_operand.vmem [shape: f32[8,256], index: 0, kind: input, shape index: {}, may-alias: {0,1}]
  %s1 = inlined_call_operand.vmem [shape: f32[8,256], index: 1, kind: output, shape index: {}, may-alias: {0,1}]
  %s2 = sld [smem:[#allocation0]]
  $region14: #{_lambda_.1} parent=0
    _
  %s4 = ssub.s32 1, %s2
  %s5 = scalar_select 0, %s4, %s2
  // Predicated region
  $region2: #{_lambda_.1} parent=0 // pred_check
    _
  $region3: #{_lambda_.1} parent=0 // pred_check_branch
    %7 = sbr.rel (0) target = $region5
  $region4: #{_lambda_.1} parent=0 // pred_region
    _
  $region5: #{_lambda_.1} parent=0 // pred_fallthru
    _
  %v8 = vld [vmem:[%s0] sm:$0xff]
  %v9 = vld [vmem:[%s0 + $0x8] sm:$0xff]
  %10 = vst [vmem:[%s1] sm:$0xff] %v8
  %11 = vst [vmem:[%s1 + $0x8] sm:$0xff] %v9
  // Predicated region
  $region6: #{_lambda_.1} parent=0 // pred_check
    _
  $region7: #{_lambda_.1} parent=0 // pred_check_branch
    %13 = sbr.rel (0) target = $region9
  $region8: #{_lambda_.1} parent=0 // pred_region
    _
  $region9: #{_lambda_.1} parent=0 // pred_fallthru
    _
  // Predicated region
  $region10: #{_lambda_.1} parent=0 // pred_check
    _
  $region11: #{_lambda_.1} parent=0 // pred_check_branch
    %15 = sbr.rel (0) target = $region13
  $region12: #{_lambda_.1} parent=0 // pred_region
    _
  $region13: #{_lambda_.1} parent=0 // pred_fallthru
    _

</llo_original>
